<compile_context>
chip_gen: v7x
topology: tpu7x:2x2x1
jax: 0.10.0
libtpu: 0.0.40
codegen_flags: <defaults>
</compile_context>

<pallas_src>
import functools

import jax
import jax.numpy as jnp
from jax.experimental import pallas as pl
from jax.experimental.pallas import tpu as pltpu


def _make_convblock1_kernel(chunk):
    def kernel(x_ref, w1_ref, shift_ref, w2_ref, b2_ref, o_ref):
        # x_ref:     (Cin, tp)  bf16  padded-input pixel tile (pixels on lanes)
        # w1_ref:    (C1, Cin)  bf16  conv1 weight with BN scale folded in
        # shift_ref: (C1, 1)    f32   folded BN shift = beta - mean * scale
        # w2_ref:    (C2, C1)   bf16  conv2 weight
        # b2_ref:    (C2, 1)    f32   conv2 bias
        # o_ref:     (C2, tp)   out_dtype
        tp = x_ref.shape[-1]
        w1 = w1_ref[...]
        w2 = w2_ref[...]
        shift = shift_ref[...]
        b2 = b2_ref[...]

        # conv1 (+ folded BN scale/shift) + ReLU over the whole tile.
        # (C1, tp) is tiny (C1=8), so keeping it resident is cheap.
        h = jnp.dot(w1, x_ref[...], preferred_element_type=jnp.float32)
        h = jnp.maximum(h + shift, 0.0).astype(w2.dtype)

        # conv2 + bias + cast + store, chunked along lanes so only a
        # (C2, chunk) f32 accumulator is live at a time and the store of the
        # dominant slab happens once per chunk (no full-tile f32 round-trip).
        for start in range(0, tp, chunk):
            c = min(chunk, tp - start)
            out = jnp.dot(w2, h[:, start:start + c],
                          preferred_element_type=jnp.float32) + b2
            o_ref[:, start:start + c] = out.astype(o_ref.dtype)

    return kernel


def _detect_num_tensorcores():
    # Best-effort: v7x exposes 2 TensorCores per chip, v5e/v6e have 1.
    try:
        dev = jax.devices()[0]
        n = int(getattr(dev, "num_cores", 1) or 1)
        return max(n, 1)
    except Exception:  # pragma: no cover - detection is advisory only
        return 1


def convblock1_forward(x_nchw, w1, bn_gamma, bn_beta, bn_mean, bn_var,
                       w2, b2, *, eps=1e-5, tile_p=4096, chunk_p=512,
                       out_dtype=jnp.float32, num_cores=None):
    """x_nchw: (N, Cin, H, W). Returns (N, 256, H+2, W+2) in `out_dtype`.

    Implements the activation='relu' path of ConvBlock1 (eval-mode BatchNorm).
    Internals use bf16 operands with f32 MXU accumulation; out_dtype=f32 by
    default to match the PyTorch module (use bf16 to halve output HBM bytes).
    """
    N, Cin, H, W = x_nchw.shape
    C1 = w1.shape[0]          # conv1 out channels
    C2 = w2.shape[0]          # 256

    # conv1 has kernel_size=1 but padding=1 -> zero border, spatial grows by 2.
    Hp, Wp = H + 2, W + 2
    P = Hp * Wp               # pixels per image

    if num_cores is None:
        num_cores = _detect_num_tensorcores()

    # --- pixel tiling --------------------------------------------------------
    # Big tiles amortize the ~0.35us per-grid-step overhead.  Only force extra
    # splits when there are fewer blocks than TensorCores (v7x) AND each block
    # would still hold >= 128 real pixels.  No explicit lane padding: the grid
    # is cdiv(P, tp) and Pallas masks the partial final block.
    n_pt = pl.cdiv(P, tile_p)
    while N * n_pt < num_cores and (P // (n_pt + 1)) >= 128:
        n_pt += 1
    if n_pt == 1:
        tp = P                                        # full-dim block
    else:
        tp = pl.cdiv(pl.cdiv(P, n_pt), 128) * 128     # lane-aligned block
        n_pt = pl.cdiv(P, tp)
    chunk = min(chunk_p, tp)

    # --- prepare operands (cheap: input has Cin channels vs C2=256 outputs) --
    x_pad = jnp.pad(x_nchw.astype(jnp.bfloat16),
                    ((0, 0), (0, 0), (1, 1), (1, 1)))
    x_rows = x_pad.reshape(N, Cin, P)

    # Fold eval-mode BatchNorm: scale into conv1 weights, keep shift as an add.
    scale = (bn_gamma.astype(jnp.float32)
             / jnp.sqrt(bn_var.astype(jnp.float32) + eps))            # (C1,)
    w1s = (w1.reshape(C1, Cin).astype(jnp.float32)
           * scale[:, None]).astype(jnp.bfloat16)                     # (C1, Cin)
    shift = (bn_beta.astype(jnp.float32)
             - bn_mean.astype(jnp.float32) * scale).reshape(C1, 1)    # (C1, 1)
    w2m = w2.reshape(C2, C1).astype(jnp.bfloat16)                     # (C2, C1)
    b2c = b2.astype(jnp.float32).reshape(C2, 1)                       # (C2, 1)

    # --- explicit VMEM budget -------------------------------------------------
    out_isz = jnp.dtype(out_dtype).itemsize
    vmem_est = (2 * Cin * tp * 2                 # x block, double-buffered bf16
                + 2 * C2 * tp * out_isz          # out block, double-buffered
                + (C1 * Cin + C2 * C1) * 2       # weights (bf16)
                + (C1 + C2) * 4                  # shift + bias (f32)
                + C1 * tp * (4 + 2)              # h intermediate f32 + bf16
                + 2 * C2 * chunk * 4)            # per-chunk conv2 acc/epilogue
    vmem_limit = int(min(max(2 * vmem_est, 8 << 20), 32 << 20))

    grid = (N, n_pt)
    out = pl.pallas_call(
        _make_convblock1_kernel(chunk),
        out_shape=jax.ShapeDtypeStruct((N, C2, P), out_dtype),
        grid_spec=pltpu.PrefetchScalarGridSpec(
            num_scalar_prefetch=0,
            grid=grid,
            in_specs=[
                pl.BlockSpec((None, Cin, tp), lambda n, j: (n, 0, j)),
                pl.BlockSpec((C1, Cin), lambda n, j: (0, 0)),
                pl.BlockSpec((C1, 1), lambda n, j: (0, 0)),
                pl.BlockSpec((C2, C1), lambda n, j: (0, 0)),
                pl.BlockSpec((C2, 1), lambda n, j: (0, 0)),
            ],
            out_specs=pl.BlockSpec((None, C2, tp), lambda n, j: (n, 0, j)),
        ),
        compiler_params=pltpu.CompilerParams(
            dimension_semantics=("parallel", "parallel"),
            vmem_limit_bytes=vmem_limit),
    )(x_rows, w1s, shift, w2m, b2c)

    # (N, C2, Hp*Wp) -> (N, C2, Hp, Wp): last-dim split, no data movement.
    return out.reshape(N, C2, Hp, Wp)


def _reference_forward(x_nchw, w1, bn_gamma, bn_beta, bn_mean, bn_var,
                       w2, b2, eps=1e-5):
    """Pure-JAX f32 reference (same math, no Pallas) for the correctness check."""
    N, Cin, H, W = x_nchw.shape
    C1 = w1.shape[0]
    C2 = w2.shape[0]
    x_pad = jnp.pad(x_nchw, ((0, 0), (0, 0), (1, 1), (1, 1)))
    h = jnp.einsum("nchw,oc->nohw", x_pad, w1.reshape(C1, Cin))
    scale = bn_gamma / jnp.sqrt(bn_var + eps)
    shift = bn_beta - bn_mean * scale
    h = h * scale[None, :, None, None] + shift[None, :, None, None]
    h = jnp.maximum(h, 0.0)
    out = jnp.einsum("nchw,oc->nohw", h, w2.reshape(C2, C1))
    return out + b2[None, :, None, None]


if __name__ == "__main__":
    key = jax.random.PRNGKey(0)
    k_x, k_w1, k_g, k_b, k_m, k_v, k_w2, k_b2 = jax.random.split(key, 8)

    # Small shapes consistent with the module.
    N, Cin, H, W = 2, 4, 16, 16
    C1 = 8        # conv1 out_channels
    C2 = 256      # conv2 out channels (fixed by the module)

    x = jax.random.normal(k_x, (N, Cin, H, W), dtype=jnp.float32)

    # Deterministic synthetic parameters (shapes from nn.Module __init__).
    w1 = jax.random.normal(k_w1, (C1, Cin, 1, 1), dtype=jnp.float32) * 0.1
    bn_gamma = 1.0 + 0.1 * jax.random.normal(k_g, (C1,), dtype=jnp.float32)
    bn_beta = 0.1 * jax.random.normal(k_b, (C1,), dtype=jnp.float32)
    bn_mean = 0.1 * jax.random.normal(k_m, (C1,), dtype=jnp.float32)
    bn_var = jnp.abs(jax.random.normal(k_v, (C1,), dtype=jnp.float32)) + 0.5
    w2 = jax.random.normal(k_w2, (C2, C1, 1, 1), dtype=jnp.float32) * 0.1
    b2 = 0.1 * jax.random.normal(k_b2, (C2,), dtype=jnp.float32)

    fwd = jax.jit(functools.partial(convblock1_forward))
    out = fwd(x, w1, bn_gamma, bn_beta, bn_mean, bn_var, w2, b2)
    out = jax.block_until_ready(out)

    assert out.shape == (N, C2, H + 2, W + 2), out.shape

    ref = _reference_forward(x, w1, bn_gamma, bn_beta, bn_mean, bn_var, w2, b2)
    ref = jax.block_until_ready(ref)
    # bf16 operands with f32 accumulation -> loosened tolerance vs f32 ref.
    assert jnp.allclose(out.astype(jnp.float32), ref, atol=3e-2, rtol=3e-2)

    print("KERNEL_OK")
</pallas_src>

<mosaic_0001>
module attributes {stable_mosaic.version = 11 : i64} {
  func.func @kernel(%arg0: i32, %arg1: i32, %arg2: memref<1x4x324xbf16, #tpu.memory_space<vmem>>, %arg3: memref<8x4xbf16, #tpu.memory_space<vmem>>, %arg4: memref<8x1xf32, #tpu.memory_space<vmem>>, %arg5: memref<256x8xbf16, #tpu.memory_space<vmem>>, %arg6: memref<256x1xf32, #tpu.memory_space<vmem>>, %arg7: memref<1x256x324xf32, #tpu.memory_space<vmem>>) attributes {dimension_semantics = [#tpu.dimension_semantics<parallel>, #tpu.dimension_semantics<parallel>], iteration_bounds = array<i64: 2, 1>, scalar_prefetch = 0 : i64, scratch_operands = 0 : i64, tpu.core_type = #tpu.core_type<tc>, window_params = [{transform_indices = @transform_0, window_bounds = array<i64: 1, 4, 324>}, {pipeline_mode = #tpu.pipeline_mode<synchronous>, transform_indices = @transform_1, window_bounds = array<i64: 8, 4>}, {pipeline_mode = #tpu.pipeline_mode<synchronous>, transform_indices = @transform_2, window_bounds = array<i64: 8, 1>}, {pipeline_mode = #tpu.pipeline_mode<synchronous>, transform_indices = @transform_3, window_bounds = array<i64: 256, 8>}, {pipeline_mode = #tpu.pipeline_mode<synchronous>, transform_indices = @transform_4, window_bounds = array<i64: 256, 1>}, {transform_indices = @transform_5, window_bounds = array<i64: 1, 256, 324>}]} {
    %c0 = arith.constant 0 : index
    %c0_0 = arith.constant 0 : index
    %0 = vector.load %arg3[%c0, %c0_0] : memref<8x4xbf16, #tpu.memory_space<vmem>>, vector<8x4xbf16>
    %c0_1 = arith.constant 0 : index
    %c0_2 = arith.constant 0 : index
    %1 = vector.load %arg5[%c0_1, %c0_2] : memref<256x8xbf16, #tpu.memory_space<vmem>>, vector<256x8xbf16>
    %c0_3 = arith.constant 0 : index
    %c0_4 = arith.constant 0 : index
    %2 = vector.load %arg4[%c0_3, %c0_4] : memref<8x1xf32, #tpu.memory_space<vmem>>, vector<8x1xf32>
    %c0_5 = arith.constant 0 : index
    %c0_6 = arith.constant 0 : index
    %3 = vector.load %arg6[%c0_5, %c0_6] : memref<256x1xf32, #tpu.memory_space<vmem>>, vector<256x1xf32>
    %c0_7 = arith.constant 0 : index
    %c0_8 = arith.constant 0 : index
    %c0_9 = arith.constant 0 : index
    %4 = vector.load %arg2[%c0_7, %c0_8, %c0_9] : memref<1x4x324xbf16, #tpu.memory_space<vmem>>, vector<1x4x324xbf16>
    %5 = vector.shape_cast %4 : vector<1x4x324xbf16> to vector<4x324xbf16>
    %cst = arith.constant dense<0.000000e+00> : vector<8x324xf32>
    %6 = tpu.matmul %0, %5, %cst {dimension_numbers = #tpu.dot_dimension_numbers<[1], [0], [0], [1], [0, 0, 1, 1], [], []>} : vector<8x4xbf16>, vector<4x324xbf16>, vector<8x324xf32> -> vector<8x324xf32>
    %7 = vector.broadcast %2 : vector<8x1xf32> to vector<8x324xf32>
    %8 = arith.addf %6, %7 : vector<8x324xf32>
    %cst_10 = arith.constant 0.000000e+00 : f32
    %9 = vector.broadcast %cst_10 : f32 to vector<8x324xf32>
    %10 = arith.maximumf %8, %9 : vector<8x324xf32>
    %11 = arith.truncf %10 : vector<8x324xf32> to vector<8x324xbf16>
    %cst_11 = arith.constant dense<0.000000e+00> : vector<256x324xf32>
    %12 = tpu.matmul %1, %11, %cst_11 {dimension_numbers = #tpu.dot_dimension_numbers<[1], [0], [0], [1], [0, 0, 1, 1], [], []>} : vector<256x8xbf16>, vector<8x324xbf16>, vector<256x324xf32> -> vector<256x324xf32>
    %13 = vector.broadcast %3 : vector<256x1xf32> to vector<256x324xf32>
    %14 = arith.addf %12, %13 : vector<256x324xf32>
    %c0_12 = arith.constant 0 : index
    %c0_13 = arith.constant 0 : index
    %c0_14 = arith.constant 0 : index
    %15 = vector.load %arg7[%c0_12, %c0_13, %c0_14] : memref<1x256x324xf32, #tpu.memory_space<vmem>>, vector<1x256x324xf32>
    %16 = vector.shape_cast %15 : vector<1x256x324xf32> to vector<256x324xf32>
    %17 = vector.shape_cast %14 : vector<256x324xf32> to vector<1x256x324xf32>
    tpu.vector_store %arg7[%c0_12, %c0_13, %c0_14], %17 {strides = array<i32>} : memref<1x256x324xf32, #tpu.memory_space<vmem>>, vector<1x256x324xf32>,
    return
  }
  func.func @transform_0(%arg0: i32, %arg1: i32) -> (i32, i32, i32) {
    %c0_i32 = arith.constant 0 : i32
    %c0_i32_0 = arith.constant 0 : i32
    return %arg0, %c0_i32, %arg1 : i32, i32, i32
  }
  func.func @transform_1(%arg0: i32, %arg1: i32) -> (i32, i32) {
    %c0_i32 = arith.constant 0 : i32
    %c0_i32_0 = arith.constant 0 : i32
    %c0_i32_1 = arith.constant 0 : i32
    return %c0_i32, %c0_i32_0 : i32, i32
  }
  func.func @transform_2(%arg0: i32, %arg1: i32) -> (i32, i32) {
    %c0_i32 = arith.constant 0 : i32
    %c0_i32_0 = arith.constant 0 : i32
    %c0_i32_1 = arith.constant 0 : i32
    return %c0_i32, %c0_i32_0 : i32, i32
  }
  func.func @transform_3(%arg0: i32, %arg1: i32) -> (i32, i32) {
    %c0_i32 = arith.constant 0 : i32
    %c0_i32_0 = arith.constant 0 : i32
    %c0_i32_1 = arith.constant 0 : i32
    return %c0_i32, %c0_i32_0 : i32, i32
  }
  func.func @transform_4(%arg0: i32, %arg1: i32) -> (i32, i32) {
    %c0_i32 = arith.constant 0 : i32
    %c0_i32_0 = arith.constant 0 : i32
    %c0_i32_1 = arith.constant 0 : i32
    return %c0_i32, %c0_i32_0 : i32, i32
  }
  func.func @transform_5(%arg0: i32, %arg1: i32) -> (i32, i32, i32) {
    %c0_i32 = arith.constant 0 : i32
    %c0_i32_0 = arith.constant 0 : i32
    return %arg0, %c0_i32, %arg1 : i32, i32, i32
  }
}

</mosaic_0001>

<llo_original>
// kernel: convblock1_forward.1
$region0: #{convblock1_forward.1}
  #allocation0 [shape = 'u32[]', space=smem, size = 0x4, offset = 0x4, fixed_abs, tag = 'smem constant byte address 0x4 - core index']
  #allocation1 [shape = 'u32[144,128]{1,0:T(1,128)}', space=vmem, size = 0x12000, scoped, tag = 'internal scratch']
  %s0 = inlined_call_operand.vmem [shape: bf16[2,4,324], index: 0, kind: input, shape index: {}]
  %s1 = inlined_call_operand.vmem [shape: bf16[8,4], index: 1, kind: input, shape index: {}]
  %s2 = inlined_call_operand.vmem [shape: f32[8,1], index: 2, kind: input, shape index: {}]
  %s3 = inlined_call_operand.vmem [shape: bf16[256,8], index: 3, kind: input, shape index: {}]
  %s4 = inlined_call_operand.vmem [shape: f32[256,1], index: 4, kind: input, shape index: {}]
  %s5 = inlined_call_operand.vmem [shape: f32[2,256,324], index: 5, kind: output, shape index: {}]
  %s6 = sld [smem:[#allocation0]]
  $region53: #{convblock1_forward.1} parent=0
    _
  %s8 = ssub.s32 1, %s6
  %s9 = scalar_select 0, %s8, %s6
  loop: start=0, step=1, limit=4
  $region2: #{convblock1_forward.1} parent=0 // loop_pre_header
    _
  $region3: #{convblock1_forward.1} parent=0 // loop_header
    %s11 = sphi 0, %s15
    %p12 = scmp.ge.s32.totalorder %s11, 4
    %s18 = sphi 0, %s30
    %s19 = sphi 0, %s26
    %s20 = sphi 0, %s18
    %s21 = sphi 0, %s19
    %s22 = sphi 0, %s20
    %s23 = sphi 0, %s21
    %s35 = sphi 0, %s37
    %s38 = sphi 0, %s35
    %s39 = sphi 0, %s38
    %s55 = sphi 0, %s39
    %s59 = sphi 0, %s59
    %s61 = sphi 0, %s59
    %s62 = sphi 0, %s61
    %s76 = sphi 0, %s62
    %s80 = sphi 0, %s80
    %s82 = sphi 0, %s80
    %s83 = sphi 0, %s82
    %s97 = sphi 0, %s83
    %s101 = sphi 0, %s101
    %s103 = sphi 0, %s101
    %s104 = sphi 0, %s103
    %s118 = sphi 0, %s104
    %s122 = sphi 0, %s122
    %s124 = sphi 0, %s122
    %s125 = sphi 0, %s124
    %s139 = sphi 0, %s125
    %s147 = sphi 0, %s149
    %s150 = sphi 0, %s147
    %s151 = sphi 0, %s150
    %s167 = sphi 0, %s151
  $region4: #{convblock1_forward.1} parent=0 // loop_header_branch
    %14 = sbr.rel (%p12) target = $region8
  $region5: #{convblock1_forward.1} parent=0 // loop_body
    %s16 = ssub.s32 %s11, 1
    %s17 = ssub.s32 %s11, 2
    %s24 = sadd.s32 1, %s19
    %p25 = scmp.ge.s32.totalorder %s24, 1
    %s26 = scalar_select %p25, 0, %s24
    %s27 = sadd.s32 1, %s18
    %s28 = scalar_select %p25, %s27, %s18
    %p29 = scmp.ge.s32.totalorder %s28, 2
    %s30 = scalar_select %p29, 0, %s28
    %s31 = ssub.s32 %s18, %s30
    %s32 = ssub.s32 %s19, %s26
    %s33 = sor.u32 %s31, %s32
    %p34 = scmp.eq.s32.totalorder %s33, 0
    %s36 = sadd.s32 %s35, 1
    %s37 = scalar_select %p34, %s35, %s36
    %p40 = pneg %p34
    %p41 = scmp.eq.s32.totalorder %s11, 1
    %p42 = por %p40, %p41
    %p43 = scmp.ne.s32.totalorder %s35, %s38
    %p44 = scmp.eq.s32.totalorder %s11, 0
    %p45 = por %p43, %p44
    %p46 = scmp.ne.s32.totalorder %s35, %s38
    %p47 = scmp.eq.s32.totalorder %s16, 1
    %p48 = por %p46, %p47
    %p49 = scmp.ne.s32.totalorder %s38, %s39
    %p50 = scmp.eq.s32.totalorder %s16, 0
    %p51 = por %p49, %p50
    %p52 = scmp.ne.s32.totalorder %s38, %s39
    %p53 = scmp.eq.s32.totalorder %s17, 1
    %p54 = por %p52, %p53
    %p56 = scmp.ne.s32.totalorder %s39, %s55
    %p57 = scmp.eq.s32.totalorder %s17, 0
    %p58 = por %p56, %p57
    %s60 = sadd.s32 %s59, 1
    %p63 = scmp.eq.s32.totalorder %s11, 1
    %p64 = scmp.ne.s32.totalorder %s59, %s61
    %p65 = scmp.eq.s32.totalorder %s11, 0
    %p66 = por %p64, %p65
    %p67 = scmp.ne.s32.totalorder %s59, %s61
    %p68 = scmp.eq.s32.totalorder %s16, 1
    %p69 = por %p67, %p68
    %p70 = scmp.ne.s32.totalorder %s61, %s62
    %p71 = scmp.eq.s32.totalorder %s16, 0
    %p72 = por %p70, %p71
    %p73 = scmp.ne.s32.totalorder %s61, %s62
    %p74 = scmp.eq.s32.totalorder %s17, 1
    %p75 = por %p73, %p74
    %p77 = scmp.ne.s32.totalorder %s62, %s76
    %p78 = scmp.eq.s32.totalorder %s17, 0
    %p79 = por %p77, %p78
    %s81 = sadd.s32 %s80, 1
    %p84 = scmp.eq.s32.totalorder %s11, 1
    %p85 = scmp.ne.s32.totalorder %s80, %s82
    %p86 = scmp.eq.s32.totalorder %s11, 0
    %p87 = por %p85, %p86
    %p88 = scmp.ne.s32.totalorder %s80, %s82
    %p89 = scmp.eq.s32.totalorder %s16, 1
    %p90 = por %p88, %p89
    %p91 = scmp.ne.s32.totalorder %s82, %s83
    %p92 = scmp.eq.s32.totalorder %s16, 0
    %p93 = por %p91, %p92
    %p94 = scmp.ne.s32.totalorder %s82, %s83
    %p95 = scmp.eq.s32.totalorder %s17, 1
    %p96 = por %p94, %p95
    %p98 = scmp.ne.s32.totalorder %s83, %s97
    %p99 = scmp.eq.s32.totalorder %s17, 0
    %p100 = por %p98, %p99
    %s102 = sadd.s32 %s101, 1
    %p105 = scmp.eq.s32.totalorder %s11, 1
    %p106 = scmp.ne.s32.totalorder %s101, %s103
    %p107 = scmp.eq.s32.totalorder %s11, 0
    %p108 = por %p106, %p107
    %p109 = scmp.ne.s32.totalorder %s101, %s103
    %p110 = scmp.eq.s32.totalorder %s16, 1
    %p111 = por %p109, %p110
    %p112 = scmp.ne.s32.totalorder %s103, %s104
    %p113 = scmp.eq.s32.totalorder %s16, 0
    %p114 = por %p112, %p113
    %p115 = scmp.ne.s32.totalorder %s103, %s104
    %p116 = scmp.eq.s32.totalorder %s17, 1
    %p117 = por %p115, %p116
    %p119 = scmp.ne.s32.totalorder %s104, %s118
    %p120 = scmp.eq.s32.totalorder %s17, 0
    %p121 = por %p119, %p120
    %s123 = sadd.s32 %s122, 1
    %p126 = scmp.eq.s32.totalorder %s11, 1
    %p127 = scmp.ne.s32.totalorder %s122, %s124
    %p128 = scmp.eq.s32.totalorder %s11, 0
    %p129 = por %p127, %p128
    %p130 = scmp.ne.s32.totalorder %s122, %s124
    %p131 = scmp.eq.s32.totalorder %s16, 1
    %p132 = por %p130, %p131
    %p133 = scmp.ne.s32.totalorder %s124, %s125
    %p134 = scmp.eq.s32.totalorder %s16, 0
    %p135 = por %p133, %p134
    %p136 = scmp.ne.s32.totalorder %s124, %s125
    %p137 = scmp.eq.s32.totalorder %s17, 1
    %p138 = por %p136, %p137
    %p140 = scmp.ne.s32.totalorder %s125, %s139
    %p141 = scmp.eq.s32.totalorder %s17, 0
    %p142 = por %p140, %p141
    %s143 = ssub.s32 %s18, %s30
    %s144 = ssub.s32 %s19, %s26
    %s145 = sor.u32 %s143, %s144
    %p146 = scmp.eq.s32.totalorder %s145, 0
    %s148 = sadd.s32 %s147, 1
    %s149 = scalar_select %p146, %s147, %s148
    %p152 = pneg %p146
    %p153 = scmp.eq.s32.totalorder %s11, 1
    %p154 = por %p152, %p153
    %p155 = scmp.ne.s32.totalorder %s147, %s150
    %p156 = scmp.eq.s32.totalorder %s11, 0
    %p157 = por %p155, %p156
    %p158 = scmp.ne.s32.totalorder %s147, %s150
    %p159 = scmp.eq.s32.totalorder %s16, 1
    %p160 = por %p158, %p159
    %p161 = scmp.ne.s32.totalorder %s150, %s151
    %p162 = scmp.eq.s32.totalorder %s16, 0
    %p163 = por %p161, %p162
    %p164 = scmp.ne.s32.totalorder %s150, %s151
    %p165 = scmp.eq.s32.totalorder %s17, 1
    %p166 = por %p164, %p165
    %p168 = scmp.ne.s32.totalorder %s151, %s167
    %p169 = scmp.eq.s32.totalorder %s17, 0
    %p170 = por %p168, %p169
    %p171 = scmp.le.s32.totalorder 1, %s11
    %p172 = scmp.lt.s32.totalorder %s11, 3
    %p173 = pnand %p171, %p172
    %p174 = pneg %p173
    // Predicated region
    $region9: #{convblock1_forward.1} parent=5 // pred_check
      _
    $region10: #{convblock1_forward.1} parent=5 // pred_check_branch
      %176 = sbr.rel (%p173) target = $region12
    $region11: #{convblock1_forward.1} parent=5 // pred_region
      %s177 = ssub.s32 %s11, 1
      // Predicated region
      $region13: #{convblock1_forward.1} parent=11 // pred_check
        %p178 = pneg %p72
      $region14: #{convblock1_forward.1} parent=11 // pred_check_branch
        %180 = sbr.rel (%p178) target = $region16
      $region15: #{convblock1_forward.1} parent=11 // pred_region
        _
      $region16: #{convblock1_forward.1} parent=11 // pred_fallthru
        _
      // Predicated region
      $region17: #{convblock1_forward.1} parent=11 // pred_check
        %p181 = pneg %p93
      $region18: #{convblock1_forward.1} parent=11 // pred_check_branch
        %183 = sbr.rel (%p181) target = $region20
      $region19: #{convblock1_forward.1} parent=11 // pred_region
        _
      $region20: #{convblock1_forward.1} parent=11 // pred_fallthru
        _
      // Predicated region
      $region21: #{convblock1_forward.1} parent=11 // pred_check
        %p184 = pneg %p114
      $region22: #{convblock1_forward.1} parent=11 // pred_check_branch
        %186 = sbr.rel (%p184) target = $region24
      $region23: #{convblock1_forward.1} parent=11 // pred_region
        _
      $region24: #{convblock1_forward.1} parent=11 // pred_fallthru
        _
      // Predicated region
      $region25: #{convblock1_forward.1} parent=11 // pred_check
        %p187 = pneg %p135
      $region26: #{convblock1_forward.1} parent=11 // pred_check_branch
        %189 = sbr.rel (%p187) target = $region28
      $region27: #{convblock1_forward.1} parent=11 // pred_region
        _
      $region28: #{convblock1_forward.1} parent=11 // pred_fallthru
        _
    $region12: #{convblock1_forward.1} parent=5 // pred_fallthru
      _
    %p190 = scmp.lt.s32.totalorder %s11, 2
    // Predicated region
    $region29: #{convblock1_forward.1} parent=5 // pred_check
      %p191 = pneg %p190
    $region30: #{convblock1_forward.1} parent=5 // pred_check_branch
      %193 = sbr.rel (%p191) target = $region32
    $region31: #{convblock1_forward.1} parent=5 // pred_region
      // Predicated region
      $region33: #{convblock1_forward.1} parent=31 // pred_check
        %p194 = pneg %p45
      $region34: #{convblock1_forward.1} parent=31 // pred_check_branch
        %196 = sbr.rel (%p194) target = $region36
      $region35: #{convblock1_forward.1} parent=31 // pred_region
        %s197 = smul.u32 3, %s19
        %p198 = scmp.lt.s32.totalorder %s18, 1
        %s199 = scalar_select %p198, %s18, 1
        %p200 = scmp.lt.s32.totalorder %s197, 2
        %s201 = scalar_select %p200, %s197, 2
        %s202 = smul.addr %s199, 3
        %s203 = sadd.s32 %s201, %s202
        %s204 = smul.addr %s203, 2
        %s205 = scalar_lea.vmem %s0, %s204
        %s206 = smul.u32 3, %s19
      $region36: #{convblock1_forward.1} parent=31 // pred_fallthru
        _
    $region32: #{convblock1_forward.1} parent=5 // pred_fallthru
      _
    %p207 = scmp.le.s32.totalorder 1, %s11
    %p208 = scmp.lt.s32.totalorder %s11, 3
    %p209 = pnand %p207, %p208
    %p210 = pneg %p209
    // Predicated region
    $region37: #{convblock1_forward.1} parent=5 // pred_check
      _
    $region38: #{convblock1_forward.1} parent=5 // pred_check_branch
      %212 = sbr.rel (%p209) target = $region40
    $region39: #{convblock1_forward.1} parent=5 // pred_region
      %s213 = ssub.s32 %s11, 1
      %s214 = smul.u32 3, %s21
      %p215 = scmp.lt.s32.totalorder %s20, 1
      %s216 = scalar_select %p215, %s20, 1
      %p217 = scmp.lt.s32.totalorder %s214, 2
      %s218 = scalar_select %p217, %s214, 2
      %s219 = smul.addr %s216, 3
      %s220 = sadd.s32 %s218, %s219
      %s221 = smul.addr %s220, 2
      %s222 = scalar_lea.vmem %s0, %s221
      %p223 = pneg %p51
      %p224 = pneg %p48
      %p225 = pneg %p72
      %p226 = pneg %p69
      %p227 = pneg %p93
      %p228 = pneg %p90
      %p229 = pneg %p114
      %p230 = pneg %p111
      %p231 = pneg %p135
      %p232 = pneg %p132
      %p233 = pneg %p163
      %p234 = pneg %p160
      %s235 = smul.u32 3, %s21
      %p236 = scmp.lt.s32.totalorder %s20, 1
      %s237 = scalar_select %p236, %s20, 1
      %p238 = scmp.lt.s32.totalorder %s235, 2
      %s239 = scalar_select %p238, %s235, 2
      %s240 = smul.addr %s237, 96
      %s241 = sadd.s32 %s239, %s240
      %s242 = smul.addr %s241, 8
      %s243 = scalar_lea.vmem %s5, %s242
      %s244 = smul.u32 3, %s21
      %p245 = scmp.lt.s32.totalorder %s20, 1
      %s246 = scalar_select %p245, %s20, 1
      %p247 = scmp.lt.s32.totalorder %s244, 2
      %s248 = scalar_select %p247, %s244, 2
      %s249 = smul.addr %s246, 3
      %s250 = sadd.s32 %s248, %s249
      %s251 = smul.addr %s250, 2
      %s252 = scalar_lea.vmem %s0, %s251
      %s253 = smul.u32 3, %s21
      %s254 = smul.u32 3, %s21
      %p255 = scmp.lt.s32.totalorder %s20, 1
      %s256 = scalar_select %p255, %s20, 1
      %p257 = scmp.lt.s32.totalorder %s254, 2
      %s258 = scalar_select %p257, %s254, 2
      %s259 = smul.addr %s256, 96
      %s260 = sadd.s32 %s258, %s259
      %s261 = smul.addr %s260, 8
      %s262 = scalar_lea.vmem %s5, %s261
      %s263 = smul.u32 3, %s21
      %v265 = vld [vmem:[%s1] sm:$0xf]
      %v266 = vld [vmem:[%s3] sm:$0xf]
      %v267 = vld [vmem:[%s3 + $0x4] sm:$0xf]
      %v268 = vld [vmem:[%s3 + $0x8] sm:$0xf]
      %v269 = vld [vmem:[%s3 + $0xc] sm:$0xf]
      %v270 = vld [vmem:[%s3 + $0x10] sm:$0xf]
      %v271 = vld [vmem:[%s3 + $0x14] sm:$0xf]
      %v272 = vld [vmem:[%s3 + $0x18] sm:$0xf]
      %v273 = vld [vmem:[%s3 + $0x1c] sm:$0xf]
      %v274 = vld [vmem:[%s3 + $0x20] sm:$0xf]
      %v275 = vld [vmem:[%s3 + $0x24] sm:$0xf]
      %v276 = vld [vmem:[%s3 + $0x28] sm:$0xf]
      %v277 = vld [vmem:[%s3 + $0x2c] sm:$0xf]
      %v278 = vld [vmem:[%s3 + $0x30] sm:$0xf]
      %v279 = vld [vmem:[%s3 + $0x34] sm:$0xf]
      %v280 = vld [vmem:[%s3 + $0x38] sm:$0xf]
      %v281 = vld [vmem:[%s3 + $0x3c] sm:$0xf]
      %v282 = vld [vmem:[%s3 + $0x40] sm:$0xf]
      %v283 = vld [vmem:[%s3 + $0x44] sm:$0xf]
      %v284 = vld [vmem:[%s3 + $0x48] sm:$0xf]
      %v285 = vld [vmem:[%s3 + $0x4c] sm:$0xf]
      %v286 = vld [vmem:[%s3 + $0x50] sm:$0xf]
      %v287 = vld [vmem:[%s3 + $0x54] sm:$0xf]
      %v288 = vld [vmem:[%s3 + $0x58] sm:$0xf]
      %v289 = vld [vmem:[%s3 + $0x5c] sm:$0xf]
      %v290 = vld [vmem:[%s3 + $0x60] sm:$0xf]
      %v291 = vld [vmem:[%s3 + $0x64] sm:$0xf]
      %v292 = vld [vmem:[%s3 + $0x68] sm:$0xf]
      %v293 = vld [vmem:[%s3 + $0x6c] sm:$0xf]
      %v294 = vld [vmem:[%s3 + $0x70] sm:$0xf]
      %v295 = vld [vmem:[%s3 + $0x74] sm:$0xf]
      %v296 = vld [vmem:[%s3 + $0x78] sm:$0xf]
      %v297 = vld [vmem:[%s3 + $0x7c] sm:$0xf]
      %v298 = vld [vmem:[%s2] sm:$0xff]
      %v299 = vld [vmem:[%s4] sm:$0xff]
      %v300 = vld [vmem:[%s4 + $0x8] sm:$0xff]
      %v301 = vld [vmem:[%s4 + $0x10] sm:$0xff]
      %v302 = vld [vmem:[%s4 + $0x18] sm:$0xff]
      %v303 = vld [vmem:[%s4 + $0x20] sm:$0xff]
      %v304 = vld [vmem:[%s4 + $0x28] sm:$0xff]
      %v305 = vld [vmem:[%s4 + $0x30] sm:$0xff]
      %v306 = vld [vmem:[%s4 + $0x38] sm:$0xff]
      %v307 = vld [vmem:[%s4 + $0x40] sm:$0xff]
      %v308 = vld [vmem:[%s4 + $0x48] sm:$0xff]
      %v309 = vld [vmem:[%s4 + $0x50] sm:$0xff]
      %v310 = vld [vmem:[%s4 + $0x58] sm:$0xff]
      %v311 = vld [vmem:[%s4 + $0x60] sm:$0xff]
      %v312 = vld [vmem:[%s4 + $0x68] sm:$0xff]
      %v313 = vld [vmem:[%s4 + $0x70] sm:$0xff]
      %v314 = vld [vmem:[%s4 + $0x78] sm:$0xff]
      %v315 = vld [vmem:[%s4 + $0x80] sm:$0xff]
      %v316 = vld [vmem:[%s4 + $0x88] sm:$0xff]
      %v317 = vld [vmem:[%s4 + $0x90] sm:$0xff]
      %v318 = vld [vmem:[%s4 + $0x98] sm:$0xff]
      %v319 = vld [vmem:[%s4 + $0xa0] sm:$0xff]
      %v320 = vld [vmem:[%s4 + $0xa8] sm:$0xff]
      %v321 = vld [vmem:[%s4 + $0xb0] sm:$0xff]
      %v322 = vld [vmem:[%s4 + $0xb8] sm:$0xff]
      %v323 = vld [vmem:[%s4 + $0xc0] sm:$0xff]
      %v324 = vld [vmem:[%s4 + $0xc8] sm:$0xff]
      %v325 = vld [vmem:[%s4 + $0xd0] sm:$0xff]
      %v326 = vld [vmem:[%s4 + $0xd8] sm:$0xff]
      %v327 = vld [vmem:[%s4 + $0xe0] sm:$0xff]
      %v328 = vld [vmem:[%s4 + $0xe8] sm:$0xff]
      %v329 = vld [vmem:[%s4 + $0xf0] sm:$0xff]
      %v330 = vld [vmem:[%s4 + $0xf8] sm:$0xff]
      %v331 = vld [vmem:[%s252] sm:$0x3f]
      %333 = vset.pattern.permute.xlu0 0
      %334 = vperm.xlu0 %333, %v298
      %v335 = vpop.permute.xlu0 %334
      %v338 = vcombine.high %v331, %v331
      %v340 = vunpack.c.l.s4 1983009808
      %v341 = vunpack.c.0.s8 %v340
      %v342 = vlaneseq
      %v343 = vshrl.u32 %v342, 7
      %v344 = vsub.s32 %v341, %v343
      %v345 = vrot.slane %v331, %v344
      %v347 = vunpack.c.l.s4 1983009808
      %v348 = vunpack.c.0.s8 %v347
      %v349 = vlaneseq
      %v350 = vshrl.u32 %v349, 7
      %v351 = vsub.s32 %v348, %v350
      %v352 = vrot.slane %v338, %v351
      %v353 = vcombine.high %v345, %v345
      %vm354 = vcmask 31744
      %v356 = vsel %vm354, %v265, 0
      %vm358 = vcmask 1041408
      %v360 = vsel %vm358, %v345, 0
      %v363 = vsel %vm358, %v353, 0
      %v366 = vsel %vm358, %v352, 0
      %368 = vmatprep.subr.bf16.mxu0 %v363
      %369 = vmatpush1.bf16.msra.mxu0 %v360
      %370 = vmatprep.subr.bf16.mxu0 0
      %371 = vmatpush1.bf16.msra.mxu0 0
      %372 = vmatprep.subr.bf16.mxu0 0
      %373 = vmatpush1.bf16.msra.mxu0 0
      %374 = vmatprep.subr.bf16.mxu0 0
      %375 = vmatpush1.bf16.msra.mxu0 0
      %376 = vmatprep.subr.bf16.mxu0 0
      %377 = vmatpush1.bf16.msra.mxu0 0
      %378 = vmatprep.subr.bf16.mxu0 0
      %379 = vmatpush1.bf16.msra.mxu0 0
      %380 = vmatprep.subr.bf16.mxu0 0
      %381 = vmatpush1.bf16.msra.mxu0 0
      %382 = vmatprep.subr.bf16.mxu0 0
      %383 = vmatpush1.bf16.msra.mxu0 0
      %384 = vmatprep.subr.bf16.mxu0 0
      %385 = vmatpush1.bf16.msra.mxu0 0
      %386 = vmatprep.subr.bf16.mxu0 0
      %387 = vmatpush1.bf16.msra.mxu0 0
      %388 = vmatprep.subr.bf16.mxu0 0
      %389 = vmatpush1.bf16.msra.mxu0 0
      %390 = vmatprep.subr.bf16.mxu0 0
      %391 = vmatpush1.bf16.msra.mxu0 0
      %392 = vmatprep.subr.bf16.mxu0 0
      %393 = vmatpush1.bf16.msra.mxu0 0
      %394 = vmatprep.subr.bf16.mxu0 0
      %395 = vmatpush1.bf16.msra.mxu0 0
      %396 = vmatprep.subr.bf16.mxu0 0
      %397 = vmatpush1.bf16.msra.mxu0 0
      %398 = vmatprep.subr.bf16.mxu0 0
      %399 = vmatpush1.bf16.msra.mxu0 0
      %400 = vmatprep.mubr.bf16.mxu0 0
      %401 = vmatmul.mubr.bf16.gmra.mrb[0].mxu0 %v356
      %v402 = vpop.f32.mrb[0].mxu0
      %v403 = vadd.f32 %v335, %v402
      %v404 = vpop.f32.mrb[0].mxu0
      %v405 = vadd.f32 %v335, %v404
      %v406 = vpop.f32.mrb[0].mxu0
      %v407 = vpop.f32.mrb[0].mxu0
      %408 = vdwg.mxu0
      %409 = vmatprep.subr.bf16.mxu0 0
      %410 = vmatpush1.bf16.msra.mxu0 %v366
      %411 = vmatprep.subr.bf16.mxu0 0
      %412 = vmatpush1.bf16.msra.mxu0 0
      %413 = vmatprep.subr.bf16.mxu0 0
      %414 = vmatpush1.bf16.msra.mxu0 0
      %415 = vmatprep.subr.bf16.mxu0 0
      %416 = vmatpush1.bf16.msra.mxu0 0
      %417 = vmatprep.subr.bf16.mxu0 0
      %418 = vmatpush1.bf16.msra.mxu0 0
      %419 = vmatprep.subr.bf16.mxu0 0
      %420 = vmatpush1.bf16.msra.mxu0 0
      %421 = vmatprep.subr.bf16.mxu0 0
      %422 = vmatpush1.bf16.msra.mxu0 0
      %423 = vmatprep.subr.bf16.mxu0 0
      %424 = vmatpush1.bf16.msra.mxu0 0
      %425 = vmatprep.subr.bf16.mxu0 0
      %426 = vmatpush1.bf16.msra.mxu0 0
      %427 = vmatprep.subr.bf16.mxu0 0
      %428 = vmatpush1.bf16.msra.mxu0 0
      %429 = vmatprep.subr.bf16.mxu0 0
      %430 = vmatpush1.bf16.msra.mxu0 0
      %431 = vmatprep.subr.bf16.mxu0 0
      %432 = vmatpush1.bf16.msra.mxu0 0
      %433 = vmatprep.subr.bf16.mxu0 0
      %434 = vmatpush1.bf16.msra.mxu0 0
      %435 = vmatprep.subr.bf16.mxu0 0
      %436 = vmatpush1.bf16.msra.mxu0 0
      %437 = vmatprep.subr.bf16.mxu0 0
      %438 = vmatpush1.bf16.msra.mxu0 0
      %439 = vmatprep.subr.bf16.mxu0 0
      %440 = vmatpush1.bf16.msra.mxu0 0
      %441 = vmatprep.mubr.bf16.mxu0 0
      %442 = vmatmul.mubr.bf16.gmra.mrb[0].mxu0 %v356
      %v443 = vpop.f32.mrb[0].mxu0
      %v444 = vadd.f32 %v335, %v443
      %v445 = vpop.f32.mrb[0].mxu0
      %v446 = vpop.f32.mrb[0].mxu0
      %v447 = vpop.f32.mrb[0].mxu0
      %448 = vdwg.mxu0
      %v449 = vmax.f32 %v403, 0.0
      %v450 = vmax.f32 %v405, 0.0
      %v451 = vmax.f32 %v444, 0.0
      %v452 = vpack.c.bf16 %v449, %v449
      %v453 = vpack.c.bf16 %v450, %v450
      %v454 = vpack.c.bf16 %v451, %v451
      %456 = vset.pattern.permute.xlu0 0
      %457 = vperm.xlu0 %456, %v299
      %v458 = vpop.permute.xlu0 %457
      %461 = vset.pattern.permute.xlu0 0
      %462 = vperm.xlu0 %461, %v300
      %v463 = vpop.permute.xlu0 %462
      %466 = vset.pattern.permute.xlu0 0
      %467 = vperm.xlu0 %466, %v301
      %v468 = vpop.permute.xlu0 %467
      %471 = vset.pattern.permute.xlu0 0
      %472 = vperm.xlu0 %471, %v302
      %v473 = vpop.permute.xlu0 %472
      %476 = vset.pattern.permute.xlu0 0
      %477 = vperm.xlu0 %476, %v303
      %v478 = vpop.permute.xlu0 %477
      %481 = vset.pattern.permute.xlu0 0
      %482 = vperm.xlu0 %481, %v304
      %v483 = vpop.permute.xlu0 %482
      %486 = vset.pattern.permute.xlu0 0
      %487 = vperm.xlu0 %486, %v305
      %v488 = vpop.permute.xlu0 %487
      %491 = vset.pattern.permute.xlu0 0
      %492 = vperm.xlu0 %491, %v306
      %v493 = vpop.permute.xlu0 %492
      %496 = vset.pattern.permute.xlu0 0
      %497 = vperm.xlu0 %496, %v307
      %v498 = vpop.permute.xlu0 %497
      %501 = vset.pattern.permute.xlu0 0
      %502 = vperm.xlu0 %501, %v308
      %v503 = vpop.permute.xlu0 %502
      %506 = vset.pattern.permute.xlu0 0
      %507 = vperm.xlu0 %506, %v309
      %v508 = vpop.permute.xlu0 %507
      %511 = vset.pattern.permute.xlu0 0
      %512 = vperm.xlu0 %511, %v310
      %v513 = vpop.permute.xlu0 %512
      %516 = vset.pattern.permute.xlu0 0
      %517 = vperm.xlu0 %516, %v311
      %v518 = vpop.permute.xlu0 %517
      %521 = vset.pattern.permute.xlu0 0
      %522 = vperm.xlu0 %521, %v312
      %v523 = vpop.permute.xlu0 %522
      %526 = vset.pattern.permute.xlu0 0
      %527 = vperm.xlu0 %526, %v313
      %v528 = vpop.permute.xlu0 %527
      %531 = vset.pattern.permute.xlu0 0
      %532 = vperm.xlu0 %531, %v314
      %v533 = vpop.permute.xlu0 %532
      %536 = vset.pattern.permute.xlu0 0
      %537 = vperm.xlu0 %536, %v315
      %v538 = vpop.permute.xlu0 %537
      %541 = vset.pattern.permute.xlu0 0
      %542 = vperm.xlu0 %541, %v316
      %v543 = vpop.permute.xlu0 %542
      %546 = vset.pattern.permute.xlu0 0
      %547 = vperm.xlu0 %546, %v317
      %v548 = vpop.permute.xlu0 %547
      %551 = vset.pattern.permute.xlu0 0
      %552 = vperm.xlu0 %551, %v318
      %v553 = vpop.permute.xlu0 %552
      %556 = vset.pattern.permute.xlu0 0
      %557 = vperm.xlu0 %556, %v319
      %v558 = vpop.permute.xlu0 %557
      %561 = vset.pattern.permute.xlu0 0
      %562 = vperm.xlu0 %561, %v320
      %v563 = vpop.permute.xlu0 %562
      %566 = vset.pattern.permute.xlu0 0
      %567 = vperm.xlu0 %566, %v321
      %v568 = vpop.permute.xlu0 %567
      %571 = vset.pattern.permute.xlu0 0
      %572 = vperm.xlu0 %571, %v322
      %v573 = vpop.permute.xlu0 %572
      %576 = vset.pattern.permute.xlu0 0
      %577 = vperm.xlu0 %576, %v323
      %v578 = vpop.permute.xlu0 %577
      %581 = vset.pattern.permute.xlu0 0
      %582 = vperm.xlu0 %581, %v324
      %v583 = vpop.permute.xlu0 %582
      %586 = vset.pattern.permute.xlu0 0
      %587 = vperm.xlu0 %586, %v325
      %v588 = vpop.permute.xlu0 %587
      %591 = vset.pattern.permute.xlu0 0
      %592 = vperm.xlu0 %591, %v326
      %v593 = vpop.permute.xlu0 %592
      %596 = vset.pattern.permute.xlu0 0
      %597 = vperm.xlu0 %596, %v327
      %v598 = vpop.permute.xlu0 %597
      %601 = vset.pattern.permute.xlu0 0
      %602 = vperm.xlu0 %601, %v328
      %v603 = vpop.permute.xlu0 %602
      %606 = vset.pattern.permute.xlu0 0
      %607 = vperm.xlu0 %606, %v329
      %v608 = vpop.permute.xlu0 %607
      %611 = vset.pattern.permute.xlu0 0
      %612 = vperm.xlu0 %611, %v330
      %v613 = vpop.permute.xlu0 %612
      %v647 = vunpack.c.l.b16 %v266
      %v648 = vunpack.c.l.b16 %v267
      %v649 = vunpack.c.l.b16 %v268
      %v650 = vunpack.c.l.b16 %v269
      %v651 = vunpack.c.l.b16 %v270
      %v652 = vunpack.c.l.b16 %v271
      %v653 = vunpack.c.l.b16 %v272
      %v654 = vunpack.c.l.b16 %v273
      %v655 = vunpack.c.l.b16 %v274
      %v656 = vunpack.c.l.b16 %v275
      %v657 = vunpack.c.l.b16 %v276
      %v658 = vunpack.c.l.b16 %v277
      %v659 = vunpack.c.l.b16 %v278
      %v660 = vunpack.c.l.b16 %v279
      %v661 = vunpack.c.l.b16 %v280
      %v662 = vunpack.c.l.b16 %v281
      %v663 = vunpack.c.l.b16 %v282
      %v664 = vunpack.c.l.b16 %v283
      %v665 = vunpack.c.l.b16 %v284
      %v666 = vunpack.c.l.b16 %v285
      %v667 = vunpack.c.l.b16 %v286
      %v668 = vunpack.c.l.b16 %v287
      %v669 = vunpack.c.l.b16 %v288
      %v670 = vunpack.c.l.b16 %v289
      %v671 = vunpack.c.l.b16 %v290
      %v672 = vunpack.c.l.b16 %v291
      %v673 = vunpack.c.l.b16 %v292
      %v674 = vunpack.c.l.b16 %v293
      %v675 = vunpack.c.l.b16 %v294
      %v676 = vunpack.c.l.b16 %v295
      %v677 = vunpack.c.l.b16 %v296
      %v678 = vunpack.c.l.b16 %v297
      %v679 = vpack.c.b16 %v648, %v647
      %v680 = vpack.c.b16 %v650, %v649
      %v681 = vpack.c.b16 %v652, %v651
      %v682 = vpack.c.b16 %v654, %v653
      %v683 = vpack.c.b16 %v656, %v655
      %v684 = vpack.c.b16 %v658, %v657
      %v685 = vpack.c.b16 %v660, %v659
      %v686 = vpack.c.b16 %v662, %v661
      %v687 = vpack.c.b16 %v664, %v663
      %v688 = vpack.c.b16 %v666, %v665
      %v689 = vpack.c.b16 %v668, %v667
      %v690 = vpack.c.b16 %v670, %v669
      %v691 = vpack.c.b16 %v672, %v671
      %v692 = vpack.c.b16 %v674, %v673
      %v693 = vpack.c.b16 %v676, %v675
      %v694 = vpack.c.b16 %v678, %v677
      %vm695 = vcmask 64512
      %v697 = vsel %vm695, %v679, 0
      %v700 = vsel %vm695, %v680, 0
      %v703 = vsel %vm695, %v681, 0
      %v706 = vsel %vm695, %v682, 0
      %v709 = vsel %vm695, %v683, 0
      %v712 = vsel %vm695, %v684, 0
      %v715 = vsel %vm695, %v685, 0
      %v718 = vsel %vm695, %v686, 0
      %v721 = vsel %vm695, %v687, 0
      %v724 = vsel %vm695, %v688, 0
      %v727 = vsel %vm695, %v689, 0
      %v730 = vsel %vm695, %v690, 0
      %v733 = vsel %vm695, %v691, 0
      %v736 = vsel %vm695, %v692, 0
      %v739 = vsel %vm695, %v693, 0
      %v742 = vsel %vm695, %v694, 0
      %vm744 = vcmask 1043456
      %v746 = vsel %vm744, %v452, 0
      %v749 = vsel %vm744, %v453, 0
      %v752 = vsel %vm744, %v454, 0
      %754 = vmatprep.subr.bf16.mxu0 %v749
      %755 = vmatpush1.bf16.msra.mxu0 %v746
      %756 = vmatprep.subr.bf16.mxu0 0
      %757 = vmatpush1.bf16.msra.mxu0 0
      %758 = vmatprep.subr.bf16.mxu0 0
      %759 = vmatpush1.bf16.msra.mxu0 0
      %760 = vmatprep.subr.bf16.mxu0 0
      %761 = vmatpush1.bf16.msra.mxu0 0
      %762 = vmatprep.subr.bf16.mxu0 0
      %763 = vmatpush1.bf16.msra.mxu0 0
      %764 = vmatprep.subr.bf16.mxu0 0
      %765 = vmatpush1.bf16.msra.mxu0 0
      %766 = vmatprep.subr.bf16.mxu0 0
      %767 = vmatpush1.bf16.msra.mxu0 0
      %768 = vmatprep.subr.bf16.mxu0 0
      %769 = vmatpush1.bf16.msra.mxu0 0
      %770 = vmatprep.subr.bf16.mxu0 0
      %771 = vmatpush1.bf16.msra.mxu0 0
      %772 = vmatprep.subr.bf16.mxu0 0
      %773 = vmatpush1.bf16.msra.mxu0 0
      %774 = vmatprep.subr.bf16.mxu0 0
      %775 = vmatpush1.bf16.msra.mxu0 0
      %776 = vmatprep.subr.bf16.mxu0 0
      %777 = vmatpush1.bf16.msra.mxu0 0
      %778 = vmatprep.subr.bf16.mxu0 0
      %779 = vmatpush1.bf16.msra.mxu0 0
      %780 = vmatprep.subr.bf16.mxu0 0
      %781 = vmatpush1.bf16.msra.mxu0 0
      %782 = vmatprep.subr.bf16.mxu0 0
      %783 = vmatpush1.bf16.msra.mxu0 0
      %784 = vmatprep.subr.bf16.mxu0 0
      %785 = vmatpush1.bf16.msra.mxu0 0
      %786 = vmatprep.mubr.bf16.mxu0 0
      %787 = vmatmul.mubr.bf16.gmra.mrb[0].mxu0 %v697
      %v788 = vpop.f32.mrb[0].mxu0
      %v789 = vadd.f32 %v458, %v788
      %v790 = vpop.f32.mrb[0].mxu0
      %v791 = vadd.f32 %v458, %v790
      %v792 = vpop.f32.mrb[0].mxu0
      %v793 = vadd.f32 %v463, %v792
      %v794 = vpop.f32.mrb[0].mxu0
      %v795 = vadd.f32 %v463, %v794
      %796 = vmatprep.mubr.bf16.mxu0 0
      %797 = vmatmul.mubr.bf16.gmra.mrb[0].mxu0 %v700
      %v798 = vpop.f32.mrb[0].mxu0
      %v799 = vadd.f32 %v468, %v798
      %v800 = vpop.f32.mrb[0].mxu0
      %v801 = vadd.f32 %v468, %v800
      %v802 = vpop.f32.mrb[0].mxu0
      %v803 = vadd.f32 %v473, %v802
      %v804 = vpop.f32.mrb[0].mxu0
      %v805 = vadd.f32 %v473, %v804
      %806 = vmatprep.mubr.bf16.mxu0 0
      %807 = vmatmul.mubr.bf16.gmra.mrb[0].mxu0 %v703
      %v808 = vpop.f32.mrb[0].mxu0
      %v809 = vadd.f32 %v478, %v808
      %v810 = vpop.f32.mrb[0].mxu0
      %v811 = vadd.f32 %v478, %v810
      %v812 = vpop.f32.mrb[0].mxu0
      %v813 = vadd.f32 %v483, %v812
      %v814 = vpop.f32.mrb[0].mxu0
      %v815 = vadd.f32 %v483, %v814
      %816 = vmatprep.mubr.bf16.mxu0 0
      %817 = vmatmul.mubr.bf16.gmra.mrb[0].mxu0 %v706
      %v818 = vpop.f32.mrb[0].mxu0
      %v819 = vadd.f32 %v488, %v818
      %v820 = vpop.f32.mrb[0].mxu0
      %v821 = vadd.f32 %v488, %v820
      %v822 = vpop.f32.mrb[0].mxu0
      %v823 = vadd.f32 %v493, %v822
      %v824 = vpop.f32.mrb[0].mxu0
      %v825 = vadd.f32 %v493, %v824
      %826 = vmatprep.mubr.bf16.mxu0 0
      %827 = vmatmul.mubr.bf16.gmra.mrb[0].mxu0 %v709
      %v828 = vpop.f32.mrb[0].mxu0
      %v829 = vadd.f32 %v498, %v828
      %v830 = vpop.f32.mrb[0].mxu0
      %v831 = vadd.f32 %v498, %v830
      %v832 = vpop.f32.mrb[0].mxu0
      %v833 = vadd.f32 %v503, %v832
      %v834 = vpop.f32.mrb[0].mxu0
      %v835 = vadd.f32 %v503, %v834
      %836 = vmatprep.mubr.bf16.mxu0 0
      %837 = vmatmul.mubr.bf16.gmra.mrb[0].mxu0 %v712
      %v838 = vpop.f32.mrb[0].mxu0
      %v839 = vadd.f32 %v508, %v838
      %v840 = vpop.f32.mrb[0].mxu0
      %v841 = vadd.f32 %v508, %v840
      %v842 = vpop.f32.mrb[0].mxu0
      %v843 = vadd.f32 %v513, %v842
      %v844 = vpop.f32.mrb[0].mxu0
      %v845 = vadd.f32 %v513, %v844
      %846 = vmatprep.mubr.bf16.mxu0 0
      %847 = vmatmul.mubr.bf16.gmra.mrb[0].mxu0 %v715
      %v848 = vpop.f32.mrb[0].mxu0
      %v849 = vadd.f32 %v518, %v848
      %v850 = vpop.f32.mrb[0].mxu0
      %v851 = vadd.f32 %v518, %v850
      %v852 = vpop.f32.mrb[0].mxu0
      %v853 = vadd.f32 %v523, %v852
      %v854 = vpop.f32.mrb[0].mxu0
      %v855 = vadd.f32 %v523, %v854
      %856 = vmatprep.mubr.bf16.mxu0 0
      %857 = vmatmul.mubr.bf16.gmra.mrb[0].mxu0 %v718
      %v858 = vpop.f32.mrb[0].mxu0
      %v859 = vadd.f32 %v528, %v858
      %v860 = vpop.f32.mrb[0].mxu0
      %v861 = vadd.f32 %v528, %v860
      %v862 = vpop.f32.mrb[0].mxu0
      %v863 = vadd.f32 %v533, %v862
      %v864 = vpop.f32.mrb[0].mxu0
      %v865 = vadd.f32 %v533, %v864
      %866 = vmatprep.mubr.bf16.mxu0 0
      %867 = vmatmul.mubr.bf16.gmra.mrb[0].mxu0 %v721
      %v868 = vpop.f32.mrb[0].mxu0
      %v869 = vadd.f32 %v538, %v868
      %v870 = vpop.f32.mrb[0].mxu0
      %v871 = vadd.f32 %v538, %v870
      %v872 = vpop.f32.mrb[0].mxu0
      %v873 = vadd.f32 %v543, %v872
      %v874 = vpop.f32.mrb[0].mxu0
      %v875 = vadd.f32 %v543, %v874
      %876 = vmatprep.mubr.bf16.mxu0 0
      %877 = vmatmul.mubr.bf16.gmra.mrb[0].mxu0 %v724
      %v878 = vpop.f32.mrb[0].mxu0
      %v879 = vadd.f32 %v548, %v878
      %v880 = vpop.f32.mrb[0].mxu0
      %v881 = vadd.f32 %v548, %v880
      %v882 = vpop.f32.mrb[0].mxu0
      %v883 = vadd.f32 %v553, %v882
      %v884 = vpop.f32.mrb[0].mxu0
      %v885 = vadd.f32 %v553, %v884
      %886 = vmatprep.mubr.bf16.mxu0 0
      %887 = vmatmul.mubr.bf16.gmra.mrb[0].mxu0 %v727
      %v888 = vpop.f32.mrb[0].mxu0
      %v889 = vadd.f32 %v558, %v888
      %v890 = vpop.f32.mrb[0].mxu0
      %v891 = vadd.f32 %v558, %v890
      %v892 = vpop.f32.mrb[0].mxu0
      %v893 = vadd.f32 %v563, %v892
      %v894 = vpop.f32.mrb[0].mxu0
      %v895 = vadd.f32 %v563, %v894
      %896 = vmatprep.mubr.bf16.mxu0 0
      %897 = vmatmul.mubr.bf16.gmra.mrb[0].mxu0 %v730
      %v898 = vpop.f32.mrb[0].mxu0
      %v899 = vadd.f32 %v568, %v898
      %v900 = vpop.f32.mrb[0].mxu0
      %v901 = vadd.f32 %v568, %v900
      %v902 = vpop.f32.mrb[0].mxu0
      %v903 = vadd.f32 %v573, %v902
      %v904 = vpop.f32.mrb[0].mxu0
      %v905 = vadd.f32 %v573, %v904
      %906 = vmatprep.mubr.bf16.mxu0 0
      %907 = vmatmul.mubr.bf16.gmra.mrb[0].mxu0 %v733
      %v908 = vpop.f32.mrb[0].mxu0
      %v909 = vadd.f32 %v578, %v908
      %v910 = vpop.f32.mrb[0].mxu0
      %v911 = vadd.f32 %v578, %v910
      %v912 = vpop.f32.mrb[0].mxu0
      %v913 = vadd.f32 %v583, %v912
      %v914 = vpop.f32.mrb[0].mxu0
      %v915 = vadd.f32 %v583, %v914
      %916 = vmatprep.mubr.bf16.mxu0 0
      %917 = vmatmul.mubr.bf16.gmra.mrb[0].mxu0 %v736
      %v918 = vpop.f32.mrb[0].mxu0
      %v919 = vadd.f32 %v588, %v918
      %v920 = vpop.f32.mrb[0].mxu0
      %v921 = vadd.f32 %v588, %v920
      %v922 = vpop.f32.mrb[0].mxu0
      %v923 = vadd.f32 %v593, %v922
      %v924 = vpop.f32.mrb[0].mxu0
      %v925 = vadd.f32 %v593, %v924
      %926 = vmatprep.mubr.bf16.mxu0 0
      %927 = vmatmul.mubr.bf16.gmra.mrb[0].mxu0 %v739
      %v928 = vpop.f32.mrb[0].mxu0
      %v929 = vadd.f32 %v598, %v928
      %v930 = vpop.f32.mrb[0].mxu0
      %v931 = vadd.f32 %v598, %v930
      %v932 = vpop.f32.mrb[0].mxu0
      %v933 = vadd.f32 %v603, %v932
      %v934 = vpop.f32.mrb[0].mxu0
      %v935 = vadd.f32 %v603, %v934
      %936 = vmatprep.mubr.bf16.mxu0 0
      %937 = vmatmul.mubr.bf16.gmra.mrb[0].mxu0 %v742
      %v938 = vpop.f32.mrb[0].mxu0
      %v939 = vadd.f32 %v608, %v938
      %v940 = vpop.f32.mrb[0].mxu0
      %v941 = vadd.f32 %v608, %v940
      %v942 = vpop.f32.mrb[0].mxu0
      %v943 = vadd.f32 %v613, %v942
      %v944 = vpop.f32.mrb[0].mxu0
      %v945 = vadd.f32 %v613, %v944
      %946 = vdwg.mxu0
      %947 = vmatprep.subr.bf16.mxu0 0
      %948 = vmatpush1.bf16.msra.mxu0 %v752
      %949 = vmatprep.subr.bf16.mxu0 0
      %950 = vmatpush1.bf16.msra.mxu0 0
      %951 = vmatprep.subr.bf16.mxu0 0
      %952 = vmatpush1.bf16.msra.mxu0 0
      %953 = vmatprep.subr.bf16.mxu0 0
      %954 = vmatpush1.bf16.msra.mxu0 0
      %955 = vmatprep.subr.bf16.mxu0 0
      %956 = vmatpush1.bf16.msra.mxu0 0
      %957 = vmatprep.subr.bf16.mxu0 0
      %958 = vmatpush1.bf16.msra.mxu0 0
      %959 = vmatprep.subr.bf16.mxu0 0
      %960 = vmatpush1.bf16.msra.mxu0 0
      %961 = vmatprep.subr.bf16.mxu0 0
      %962 = vmatpush1.bf16.msra.mxu0 0
      %963 = vmatprep.subr.bf16.mxu0 0
      %964 = vmatpush1.bf16.msra.mxu0 0
      %965 = vmatprep.subr.bf16.mxu0 0
      %966 = vmatpush1.bf16.msra.mxu0 0
      %967 = vmatprep.subr.bf16.mxu0 0
      %968 = vmatpush1.bf16.msra.mxu0 0
      %969 = vmatprep.subr.bf16.mxu0 0
      %970 = vmatpush1.bf16.msra.mxu0 0
      %971 = vmatprep.subr.bf16.mxu0 0
      %972 = vmatpush1.bf16.msra.mxu0 0
      %973 = vmatprep.subr.bf16.mxu0 0
      %974 = vmatpush1.bf16.msra.mxu0 0
      %975 = vmatprep.subr.bf16.mxu0 0
      %976 = vmatpush1.bf16.msra.mxu0 0
      %977 = vmatprep.subr.bf16.mxu0 0
      %978 = vmatpush1.bf16.msra.mxu0 0
      %979 = vmatprep.mubr.bf16.mxu0 0
      %980 = vmatmul.mubr.bf16.gmra.mrb[0].mxu0 %v697
      %v981 = vpop.f32.mrb[0].mxu0
      %v982 = vadd.f32 %v458, %v981
      %v983 = vpop.f32.mrb[0].mxu0
      %v984 = vpop.f32.mrb[0].mxu0
      %v985 = vadd.f32 %v463, %v984
      %v986 = vpop.f32.mrb[0].mxu0
      %987 = vmatprep.mubr.bf16.mxu0 0
      %988 = vmatmul.mubr.bf16.gmra.mrb[0].mxu0 %v700
      %v989 = vpop.f32.mrb[0].mxu0
      %v990 = vadd.f32 %v468, %v989
      %v991 = vpop.f32.mrb[0].mxu0
      %v992 = vpop.f32.mrb[0].mxu0
      %v993 = vadd.f32 %v473, %v992
      %v994 = vpop.f32.mrb[0].mxu0
      %995 = vmatprep.mubr.bf16.mxu0 0
      %996 = vmatmul.mubr.bf16.gmra.mrb[0].mxu0 %v703
      %v997 = vpop.f32.mrb[0].mxu0
      %v998 = vadd.f32 %v478, %v997
      %v999 = vpop.f32.mrb[0].mxu0
      %v1000 = vpop.f32.mrb[0].mxu0
      %v1001 = vadd.f32 %v483, %v1000
      %v1002 = vpop.f32.mrb[0].mxu0
      %1003 = vmatprep.mubr.bf16.mxu0 0
      %1004 = vmatmul.mubr.bf16.gmra.mrb[0].mxu0 %v706
      %v1005 = vpop.f32.mrb[0].mxu0
      %v1006 = vadd.f32 %v488, %v1005
      %v1007 = vpop.f32.mrb[0].mxu0
      %v1008 = vpop.f32.mrb[0].mxu0
      %v1009 = vadd.f32 %v493, %v1008
      %v1010 = vpop.f32.mrb[0].mxu0
      %1011 = vmatprep.mubr.bf16.mxu0 0
      %1012 = vmatmul.mubr.bf16.gmra.mrb[0].mxu0 %v709
      %v1013 = vpop.f32.mrb[0].mxu0
      %v1014 = vadd.f32 %v498, %v1013
      %v1015 = vpop.f32.mrb[0].mxu0
      %v1016 = vpop.f32.mrb[0].mxu0
      %v1017 = vadd.f32 %v503, %v1016
      %v1018 = vpop.f32.mrb[0].mxu0
      %1019 = vmatprep.mubr.bf16.mxu0 0
      %1020 = vmatmul.mubr.bf16.gmra.mrb[0].mxu0 %v712
      %v1021 = vpop.f32.mrb[0].mxu0
      %v1022 = vadd.f32 %v508, %v1021
      %v1023 = vpop.f32.mrb[0].mxu0
      %v1024 = vpop.f32.mrb[0].mxu0
      %v1025 = vadd.f32 %v513, %v1024
      %v1026 = vpop.f32.mrb[0].mxu0
      %1027 = vmatprep.mubr.bf16.mxu0 0
      %1028 = vmatmul.mubr.bf16.gmra.mrb[0].mxu0 %v715
      %v1029 = vpop.f32.mrb[0].mxu0
      %v1030 = vadd.f32 %v518, %v1029
      %v1031 = vpop.f32.mrb[0].mxu0
      %v1032 = vpop.f32.mrb[0].mxu0
      %v1033 = vadd.f32 %v523, %v1032
      %v1034 = vpop.f32.mrb[0].mxu0
      %1035 = vmatprep.mubr.bf16.mxu0 0
      %1036 = vmatmul.mubr.bf16.gmra.mrb[0].mxu0 %v718
      %v1037 = vpop.f32.mrb[0].mxu0
      %v1038 = vadd.f32 %v528, %v1037
      %v1039 = vpop.f32.mrb[0].mxu0
      %v1040 = vpop.f32.mrb[0].mxu0
      %v1041 = vadd.f32 %v533, %v1040
      %v1042 = vpop.f32.mrb[0].mxu0
      %1043 = vmatprep.mubr.bf16.mxu0 0
      %1044 = vmatmul.mubr.bf16.gmra.mrb[0].mxu0 %v721
      %v1045 = vpop.f32.mrb[0].mxu0
      %v1046 = vadd.f32 %v538, %v1045
      %v1047 = vpop.f32.mrb[0].mxu0
      %v1048 = vpop.f32.mrb[0].mxu0
      %v1049 = vadd.f32 %v543, %v1048
      %v1050 = vpop.f32.mrb[0].mxu0
      %1051 = vmatprep.mubr.bf16.mxu0 0
      %1052 = vmatmul.mubr.bf16.gmra.mrb[0].mxu0 %v724
      %v1053 = vpop.f32.mrb[0].mxu0
      %v1054 = vadd.f32 %v548, %v1053
      %v1055 = vpop.f32.mrb[0].mxu0
      %v1056 = vpop.f32.mrb[0].mxu0
      %v1057 = vadd.f32 %v553, %v1056
      %v1058 = vpop.f32.mrb[0].mxu0
      %1059 = vmatprep.mubr.bf16.mxu0 0
      %1060 = vmatmul.mubr.bf16.gmra.mrb[0].mxu0 %v727
      %v1061 = vpop.f32.mrb[0].mxu0
      %v1062 = vadd.f32 %v558, %v1061
      %v1063 = vpop.f32.mrb[0].mxu0
      %v1064 = vpop.f32.mrb[0].mxu0
      %v1065 = vadd.f32 %v563, %v1064
      %v1066 = vpop.f32.mrb[0].mxu0
      %1067 = vmatprep.mubr.bf16.mxu0 0
      %1068 = vmatmul.mubr.bf16.gmra.mrb[0].mxu0 %v730
      %v1069 = vpop.f32.mrb[0].mxu0
      %v1070 = vadd.f32 %v568, %v1069
      %v1071 = vpop.f32.mrb[0].mxu0
      %v1072 = vpop.f32.mrb[0].mxu0
      %v1073 = vadd.f32 %v573, %v1072
      %v1074 = vpop.f32.mrb[0].mxu0
      %1075 = vmatprep.mubr.bf16.mxu0 0
      %1076 = vmatmul.mubr.bf16.gmra.mrb[0].mxu0 %v733
      %v1077 = vpop.f32.mrb[0].mxu0
      %v1078 = vadd.f32 %v578, %v1077
      %v1079 = vpop.f32.mrb[0].mxu0
      %v1080 = vpop.f32.mrb[0].mxu0
      %v1081 = vadd.f32 %v583, %v1080
      %v1082 = vpop.f32.mrb[0].mxu0
      %1083 = vmatprep.mubr.bf16.mxu0 0
      %1084 = vmatmul.mubr.bf16.gmra.mrb[0].mxu0 %v736
      %v1085 = vpop.f32.mrb[0].mxu0
      %v1086 = vadd.f32 %v588, %v1085
      %v1087 = vpop.f32.mrb[0].mxu0
      %v1088 = vpop.f32.mrb[0].mxu0
      %v1089 = vadd.f32 %v593, %v1088
      %v1090 = vpop.f32.mrb[0].mxu0
      %1091 = vmatprep.mubr.bf16.mxu0 0
      %1092 = vmatmul.mubr.bf16.gmra.mrb[0].mxu0 %v739
      %v1093 = vpop.f32.mrb[0].mxu0
      %v1094 = vadd.f32 %v598, %v1093
      %v1095 = vpop.f32.mrb[0].mxu0
      %v1096 = vpop.f32.mrb[0].mxu0
      %v1097 = vadd.f32 %v603, %v1096
      %v1098 = vpop.f32.mrb[0].mxu0
      %1099 = vmatprep.mubr.bf16.mxu0 0
      %1100 = vmatmul.mubr.bf16.gmra.mrb[0].mxu0 %v742
      %v1101 = vpop.f32.mrb[0].mxu0
      %v1102 = vadd.f32 %v608, %v1101
      %v1103 = vpop.f32.mrb[0].mxu0
      %v1104 = vpop.f32.mrb[0].mxu0
      %v1105 = vadd.f32 %v613, %v1104
      %v1106 = vpop.f32.mrb[0].mxu0
      %1107 = vdwg.mxu0
      %1108 = vst [vmem:[%s262] sm:$0xff] %v789
      %1109 = vst [vmem:[%s262 + $0x8] sm:$0xff] %v791
      %vm1110 = vcmask 556032
      %1111 = vst.msk [vmem:[%s262 + $0x10] sm:$0xff] %vm1110, %v982
      %1112 = vst [vmem:[%s262 + $0x18] sm:$0xff] %v793
      %1113 = vst [vmem:[%s262 + $0x20] sm:$0xff] %v795
      %1114 = vst.msk [vmem:[%s262 + $0x28] sm:$0xff] %vm1110, %v985
      %1115 = vst [vmem:[%s262 + $0x30] sm:$0xff] %v799
      %1116 = vst [vmem:[%s262 + $0x38] sm:$0xff] %v801
      %1117 = vst.msk [vmem:[%s262 + $0x40] sm:$0xff] %vm1110, %v990
      %1118 = vst [vmem:[%s262 + $0x48] sm:$0xff] %v803
      %1119 = vst [vmem:[%s262 + $0x50] sm:$0xff] %v805
      %1120 = vst.msk [vmem:[%s262 + $0x58] sm:$0xff] %vm1110, %v993
      %1121 = vst [vmem:[%s262 + $0x60] sm:$0xff] %v809
      %1122 = vst [vmem:[%s262 + $0x68] sm:$0xff] %v811
      %1123 = vst.msk [vmem:[%s262 + $0x70] sm:$0xff] %vm1110, %v998
      %1124 = vst [vmem:[%s262 + $0x78] sm:$0xff] %v813
      %1125 = vst [vmem:[%s262 + $0x80] sm:$0xff] %v815
      %1126 = vst.msk [vmem:[%s262 + $0x88] sm:$0xff] %vm1110, %v1001
      %1127 = vst [vmem:[%s262 + $0x90] sm:$0xff] %v819
      %1128 = vst [vmem:[%s262 + $0x98] sm:$0xff] %v821
      %1129 = vst.msk [vmem:[%s262 + $0xa0] sm:$0xff] %vm1110, %v1006
      %1130 = vst [vmem:[%s262 + $0xa8] sm:$0xff] %v823
      %1131 = vst [vmem:[%s262 + $0xb0] sm:$0xff] %v825
      %1132 = vst.msk [vmem:[%s262 + $0xb8] sm:$0xff] %vm1110, %v1009
      %1133 = vst [vmem:[%s262 + $0xc0] sm:$0xff] %v829
      %1134 = vst [vmem:[%s262 + $0xc8] sm:$0xff] %v831
      %1135 = vst.msk [vmem:[%s262 + $0xd0] sm:$0xff] %vm1110, %v1014
      %1136 = vst [vmem:[%s262 + $0xd8] sm:$0xff] %v833
      %1137 = vst [vmem:[%s262 + $0xe0] sm:$0xff] %v835
      %1138 = vst.msk [vmem:[%s262 + $0xe8] sm:$0xff] %vm1110, %v1017
      %1139 = vst [vmem:[%s262 + $0xf0] sm:$0xff] %v839
      %1140 = vst [vmem:[%s262 + $0xf8] sm:$0xff] %v841
      %1141 = vst.msk [vmem:[%s262 + $0x100] sm:$0xff] %vm1110, %v1022
      %1142 = vst [vmem:[%s262 + $0x108] sm:$0xff] %v843
      %1143 = vst [vmem:[%s262 + $0x110] sm:$0xff] %v845
      %1144 = vst.msk [vmem:[%s262 + $0x118] sm:$0xff] %vm1110, %v1025
      %1145 = vst [vmem:[%s262 + $0x120] sm:$0xff] %v849
      %1146 = vst [vmem:[%s262 + $0x128] sm:$0xff] %v851
      %1147 = vst.msk [vmem:[%s262 + $0x130] sm:$0xff] %vm1110, %v1030
      %1148 = vst [vmem:[%s262 + $0x138] sm:$0xff] %v853
      %1149 = vst [vmem:[%s262 + $0x140] sm:$0xff] %v855
      %1150 = vst.msk [vmem:[%s262 + $0x148] sm:$0xff] %vm1110, %v1033
      %1151 = vst [vmem:[%s262 + $0x150] sm:$0xff] %v859
      %1152 = vst [vmem:[%s262 + $0x158] sm:$0xff] %v861
      %1153 = vst.msk [vmem:[%s262 + $0x160] sm:$0xff] %vm1110, %v1038
      %1154 = vst [vmem:[%s262 + $0x168] sm:$0xff] %v863
      %1155 = vst [vmem:[%s262 + $0x170] sm:$0xff] %v865
      %1156 = vst.msk [vmem:[%s262 + $0x178] sm:$0xff] %vm1110, %v1041
      %1157 = vst [vmem:[%s262 + $0x180] sm:$0xff] %v869
      %1158 = vst [vmem:[%s262 + $0x188] sm:$0xff] %v871
      %1159 = vst.msk [vmem:[%s262 + $0x190] sm:$0xff] %vm1110, %v1046
      %1160 = vst [vmem:[%s262 + $0x198] sm:$0xff] %v873
      %1161 = vst [vmem:[%s262 + $0x1a0] sm:$0xff] %v875
      %1162 = vst.msk [vmem:[%s262 + $0x1a8] sm:$0xff] %vm1110, %v1049
      %1163 = vst [vmem:[%s262 + $0x1b0] sm:$0xff] %v879
      %1164 = vst [vmem:[%s262 + $0x1b8] sm:$0xff] %v881
      %1165 = vst.msk [vmem:[%s262 + $0x1c0] sm:$0xff] %vm1110, %v1054
      %1166 = vst [vmem:[%s262 + $0x1c8] sm:$0xff] %v883
      %1167 = vst [vmem:[%s262 + $0x1d0] sm:$0xff] %v885
      %1168 = vst.msk [vmem:[%s262 + $0x1d8] sm:$0xff] %vm1110, %v1057
      %1169 = vst [vmem:[%s262 + $0x1e0] sm:$0xff] %v889
      %1170 = vst [vmem:[%s262 + $0x1e8] sm:$0xff] %v891
      %1171 = vst.msk [vmem:[%s262 + $0x1f0] sm:$0xff] %vm1110, %v1062
      %1172 = vst [vmem:[%s262 + $0x1f8] sm:$0xff] %v893
      %1173 = vst [vmem:[%s262 + $0x200] sm:$0xff] %v895
      %1174 = vst.msk [vmem:[%s262 + $0x208] sm:$0xff] %vm1110, %v1065
      %1175 = vst [vmem:[%s262 + $0x210] sm:$0xff] %v899
      %1176 = vst [vmem:[%s262 + $0x218] sm:$0xff] %v901
      %1177 = vst.msk [vmem:[%s262 + $0x220] sm:$0xff] %vm1110, %v1070
      %1178 = vst [vmem:[%s262 + $0x228] sm:$0xff] %v903
      %1179 = vst [vmem:[%s262 + $0x230] sm:$0xff] %v905
      %1180 = vst.msk [vmem:[%s262 + $0x238] sm:$0xff] %vm1110, %v1073
      %1181 = vst [vmem:[%s262 + $0x240] sm:$0xff] %v909
      %1182 = vst [vmem:[%s262 + $0x248] sm:$0xff] %v911
      %1183 = vst.msk [vmem:[%s262 + $0x250] sm:$0xff] %vm1110, %v1078
      %1184 = vst [vmem:[%s262 + $0x258] sm:$0xff] %v913
      %1185 = vst [vmem:[%s262 + $0x260] sm:$0xff] %v915
      %1186 = vst.msk [vmem:[%s262 + $0x268] sm:$0xff] %vm1110, %v1081
      %1187 = vst [vmem:[%s262 + $0x270] sm:$0xff] %v919
      %1188 = vst [vmem:[%s262 + $0x278] sm:$0xff] %v921
      %1189 = vst.msk [vmem:[%s262 + $0x280] sm:$0xff] %vm1110, %v1086
      %1190 = vst [vmem:[%s262 + $0x288] sm:$0xff] %v923
      %1191 = vst [vmem:[%s262 + $0x290] sm:$0xff] %v925
      %1192 = vst.msk [vmem:[%s262 + $0x298] sm:$0xff] %vm1110, %v1089
      %1193 = vst [vmem:[%s262 + $0x2a0] sm:$0xff] %v929
      %1194 = vst [vmem:[%s262 + $0x2a8] sm:$0xff] %v931
      %1195 = vst.msk [vmem:[%s262 + $0x2b0] sm:$0xff] %vm1110, %v1094
      %1196 = vst [vmem:[%s262 + $0x2b8] sm:$0xff] %v933
      %1197 = vst [vmem:[%s262 + $0x2c0] sm:$0xff] %v935
      %1198 = vst.msk [vmem:[%s262 + $0x2c8] sm:$0xff] %vm1110, %v1097
      %1199 = vst [vmem:[%s262 + $0x2d0] sm:$0xff] %v939
      %1200 = vst [vmem:[%s262 + $0x2d8] sm:$0xff] %v941
      %1201 = vst.msk [vmem:[%s262 + $0x2e0] sm:$0xff] %vm1110, %v1102
      %1202 = vst [vmem:[%s262 + $0x2e8] sm:$0xff] %v943
      %1203 = vst [vmem:[%s262 + $0x2f0] sm:$0xff] %v945
      %1204 = vst.msk [vmem:[%s262 + $0x2f8] sm:$0xff] %vm1110, %v1105
      %s1205 = smul.u32 3, %s21
      %p1206 = scmp.lt.s32.totalorder %s20, 1
      %s1207 = scalar_select %p1206, %s20, 1
      %p1208 = scmp.lt.s32.totalorder %s1205, 2
      %s1209 = scalar_select %p1208, %s1205, 2
      %s1210 = smul.addr %s1207, 96
      %s1211 = sadd.s32 %s1209, %s1210
      %s1212 = smul.addr %s1211, 8
      %s1213 = scalar_lea.vmem %s5, %s1212
      // Predicated region
      $region41: #{convblock1_forward.1} parent=39 // pred_check
        %p1214 = pneg %p160
      $region42: #{convblock1_forward.1} parent=39 // pred_check_branch
        %1216 = sbr.rel (%p1214) target = $region44
      $region43: #{convblock1_forward.1} parent=39 // pred_region
        %s1217 = smul.u32 3, %s21
      $region44: #{convblock1_forward.1} parent=39 // pred_fallthru
        _
    $region40: #{convblock1_forward.1} parent=5 // pred_fallthru
      _
    %p1218 = scmp.le.s32.totalorder 2, %s11
    // Predicated region
    $region45: #{convblock1_forward.1} parent=5 // pred_check
      %p1219 = pneg %p1218
    $region46: #{convblock1_forward.1} parent=5 // pred_check_branch
      %1221 = sbr.rel (%p1219) target = $region48
    $region47: #{convblock1_forward.1} parent=5 // pred_region
      %s1222 = ssub.s32 %s11, 2
      // Predicated region
      $region49: #{convblock1_forward.1} parent=47 // pred_check
        %p1223 = pneg %p166
      $region50: #{convblock1_forward.1} parent=47 // pred_check_branch
        %1225 = sbr.rel (%p1223) target = $region52
      $region51: #{convblock1_forward.1} parent=47 // pred_region
        %s1226 = smul.u32 3, %s23
        %p1227 = scmp.lt.s32.totalorder %s22, 1
        %s1228 = scalar_select %p1227, %s22, 1
        %p1229 = scmp.lt.s32.totalorder %s1226, 2
        %s1230 = scalar_select %p1229, %s1226, 2
        %s1231 = smul.addr %s1228, 96
        %s1232 = sadd.s32 %s1230, %s1231
        %s1233 = smul.addr %s1232, 8
        %s1234 = scalar_lea.vmem %s5, %s1233
      $region52: #{convblock1_forward.1} parent=47 // pred_fallthru
        _
    $region48: #{convblock1_forward.1} parent=5 // pred_fallthru
      _
  $region6: #{convblock1_forward.1} parent=0 // loop_footer
    %s15 = sadd.s32 1, %s11
  $region7: #{convblock1_forward.1} parent=0 // loop_footer_branch
    %10 = sbr.rel target = $region3
  $region8: #{convblock1_forward.1} parent=0 // loop_exit
    _

</llo_original>
